<compile_context>
chip_gen: v7x
topology: tpu7x:2x2x1
jax: 0.10.0
libtpu: 0.0.40
codegen_flags: <defaults>
</compile_context>

<pallas_src>
from functools import partial

import jax
import jax.numpy as jnp
from jax import lax
from jax.experimental import pallas as pl
from jax.experimental.pallas import tpu as pltpu

_NEG_INF = -1e30   # plain Python float: a jnp scalar here becomes a captured kernel constant


def _ceil_to(x, q):
    return ((x + q - 1) // q) * q


def _pick_tile(dim, pref, quantum):
    """Largest tile <= pref that divides `dim` and is a multiple of `quantum`;
    falls back to the full dim (always legal: block == full array dim)."""
    if dim <= pref:
        return dim
    t = (pref // quantum) * quantum
    while t >= quantum:
        if dim % t == 0:
            return t
        t -= quantum
    return dim


def _vmem_limit(working_set_bytes):
    # ~2x headroom over the resident working set for compiler scratch; clamped so it is safe
    # on v7x (64 MiB physical / TC) while staying far below v5e/v6e's 128 MiB.
    # TODO(synk): raise toward ~96 MiB (and tq -> 512) on v5e/v6e after a per-chip sweep.
    return int(min(max(2 * working_set_bytes, 32 * 1024 * 1024), 48 * 1024 * 1024))


# ----------------------------- Linear (x @ W + b), (M, N, K)-tiled -----------------------------

def _linear_kernel(x_ref, w_ref, b_ref, o_ref, acc_ref):
    # x_ref: (tm, tk), w_ref: (tk, tn), b_ref: (1, tn) f32, o_ref: (tm, tn), acc_ref: f32.
    kk = pl.program_id(2)

    @pl.when(kk == 0)
    def _init():
        acc_ref[...] = jnp.zeros_like(acc_ref)

    acc_ref[...] += jnp.dot(x_ref[...], w_ref[...], preferred_element_type=jnp.float32)

    @pl.when(kk == pl.num_programs(2) - 1)
    def _finalize():
        o_ref[...] = (acc_ref[...] + b_ref[...]).astype(o_ref.dtype)


def pallas_linear(x, w, b, *, out_dtype=None, tm=512, tn=512, tk=512):
    """x: (B, T, Din) ; w: (Din, Dout) ; b: (Dout,) -> (B, T, Dout) = x @ w + b."""
    B, T, Din = x.shape
    Dout = w.shape[1]
    M = B * T
    out_dtype = x.dtype if out_dtype is None else out_dtype
    tm = _pick_tile(M, tm, 8)        # sublane quantum
    tn = _pick_tile(Dout, tn, 128)   # lane quantum (lane-dense stores when Dout >= 128)
    tk = _pick_tile(Din, tk, 128)    # K-tiling keeps the weight block small (v7x VMEM)
    x2 = x.reshape(M, Din)
    b2 = b.reshape(1, Dout).astype(jnp.float32)

    io_bytes = ((tm * tk + tk * tn) * x2.dtype.itemsize
                + tn * 4 + tm * tn * jnp.dtype(out_dtype).itemsize)
    working = 2 * io_bytes + tm * tn * 4          # double-buffered blocks + f32 accumulator

    out = pl.pallas_call(
        _linear_kernel,
        out_shape=jax.ShapeDtypeStruct((M, Dout), out_dtype),
        grid=(M // tm, Dout // tn, Din // tk),    # reduction (K) axis last
        in_specs=[
            pl.BlockSpec((tm, tk), lambda i, j, k: (i, k)),
            pl.BlockSpec((tk, tn), lambda i, j, k: (k, j)),
            pl.BlockSpec((1, tn), lambda i, j, k: (0, j)),
        ],
        out_specs=pl.BlockSpec((tm, tn), lambda i, j, k: (i, j)),
        scratch_shapes=[pltpu.VMEM((tm, tn), jnp.float32)],
        compiler_params=pltpu.CompilerParams(
            dimension_semantics=("parallel", "parallel", "arbitrary"),
            vmem_limit_bytes=_vmem_limit(working),
        ),
    )(x2, w, b2)
    return out.reshape(B, T, Dout)


# ----------------------------- Flash-style multi-head attention -----------------------------

def _mha_attn_kernel(q_ref, k_ref, v_ref, o_ref, m_ref, l_ref, acc_ref, *,
                     H, Dh, tq, tkv, fwd_attn, local_attn_size):
    # q_ref: (1, tq, H*Dh) ; k_ref / v_ref: (1, tkv, H*Dh) ; o_ref: (1, tq, H*Dh)
    # scratch: m_ref / l_ref (H, tq, 1) f32 running max/sum, acc_ref (tq, H*Dh) f32.
    qi = pl.program_id(1)
    ki = pl.program_id(2)
    nkv = pl.num_programs(2)
    q0 = qi * tq
    k0 = ki * tkv

    @pl.when(ki == 0)
    def _init():
        m_ref[...] = jnp.full((H, tq, 1), _NEG_INF, jnp.float32)
        l_ref[...] = jnp.zeros((H, tq, 1), jnp.float32)
        acc_ref[...] = jnp.zeros((tq, H * Dh), jnp.float32)

    def _compute():
        q = q_ref[0]          # (tq, H*Dh) bf16 -> straight to the MXU (scale folded into W_q)
        k = k_ref[0]          # (tkv, H*Dh)
        v = v_ref[0]          # (tkv, H*Dh)

        # Additive mask bias (0 / -1e30), built once per tile and shared across all heads.
        bias = None
        if fwd_attn or (local_attn_size is not None):
            row = q0 + lax.broadcasted_iota(jnp.int32, (tq, tkv), 0)
            col = k0 + lax.broadcasted_iota(jnp.int32, (tq, tkv), 1)
            masked = None
            if local_attn_size is not None:
                masked = jnp.abs(row - col) > local_attn_size
            if fwd_attn:
                fut = col > row
                masked = fut if masked is None else jnp.logical_or(masked, fut)
            bias = jnp.where(masked, _NEG_INF, 0.0).astype(jnp.float32)

        for h in range(H):                    # static unroll; every slice is 128-lane aligned
            sl = slice(h * Dh, (h + 1) * Dh)
            q_h = q[:, sl]                    # (tq, Dh)
            k_h = k[:, sl]                    # (tkv, Dh)
            v_h = v[:, sl]                    # (tkv, Dh)

            # q_h @ k_h^T: contract last dims (no transposed copy of k), full 128-wide MXU op.
            s = lax.dot_general(q_h, k_h, (((1,), (1,)), ((), ())),
                                preferred_element_type=jnp.float32)     # (tq, tkv) f32
            if bias is not None:
                s = s + bias

            m_prev = m_ref[h]                                           # (tq, 1)
            m_new = jnp.maximum(m_prev, jnp.max(s, axis=-1, keepdims=True))
            alpha = jnp.exp(m_prev - m_new)
            p = jnp.exp(s - m_new)                                      # (tq, tkv) f32
            l_ref[h] = alpha * l_ref[h] + jnp.sum(p, axis=-1, keepdims=True)
            acc_ref[:, sl] = alpha * acc_ref[:, sl] + jnp.dot(
                p.astype(v_h.dtype), v_h, preferred_element_type=jnp.float32)
            m_ref[h] = m_new

    # Skip compute for kv tiles that are entirely masked for this q tile (causal / band).
    if fwd_attn or (local_attn_size is not None):
        q_last = q0 + (tq - 1)
        k_last = k0 + (tkv - 1)
        keep = None
        if fwd_attn:
            keep = k0 <= q_last
        if local_attn_size is not None:
            band = jnp.logical_and(k0 <= q_last + local_attn_size,
                                   k_last >= q0 - local_attn_size)
            keep = band if keep is None else jnp.logical_and(keep, band)
        pl.when(keep)(_compute)
    else:
        _compute()

    @pl.when(ki == nkv - 1)
    def _finalize():
        # Per-head lane-dense (tq, Dh) stores straight into the merged-head output slab.
        for h in range(H):
            sl = slice(h * Dh, (h + 1) * Dh)
            inv = pl.reciprocal(jnp.maximum(l_ref[h], 1e-30), approx=True)   # EUP slot
            o_ref[0, :, sl] = (acc_ref[:, sl] * inv).astype(o_ref.dtype)


def pallas_mha_attention(q_arr, k_arr, v_arr, feat_blocks, *, H, Dh, fwd_attn,
                         local_attn_size, tq=256, tkv=256):
    """q_arr/k_arr/v_arr: (B, T, n*H*Dh). `feat_blocks` = (qb, kb, vb) block offsets along the
    feature axis (in units of H*Dh): pass the fused QKV tensor three times with (0, 1, 2), or
    three separate projections with (0, 0, 0). Returns merged-head attention (B, T, H*Dh)."""
    B, T, _ = q_arr.shape
    HD = H * Dh
    tq = _pick_tile(T, tq, 8)
    tkv = _pick_tile(T, tkv, 128)     # lane axis of the (tq, tkv) score tile
    qb, kb, vb = feat_blocks
    local = local_attn_size

    def kv_idx(qi, ki):
        # Clamp the kv block index to the visible range for this q tile so that DMAs for
        # fully-masked tiles alias the already-resident block and are elided by Pallas.
        idx = ki
        if fwd_attn:
            idx = jnp.minimum(idx, (qi * tq + tq - 1) // tkv)
        elif local is not None:
            idx = jnp.minimum(idx, (qi * tq + tq - 1 + local) // tkv)
        if local is not None:
            idx = jnp.maximum(idx, jnp.maximum(qi * tq - local, 0) // tkv)
        return idx

    kern = partial(_mha_attn_kernel, H=H, Dh=Dh, tq=tq, tkv=tkv,
                   fwd_attn=fwd_attn, local_attn_size=local)

    itemsize = jnp.dtype(q_arr.dtype).itemsize
    io_bytes = (2 * tq * HD + 2 * tkv * HD) * itemsize        # q + out, k + v blocks
    working = 2 * io_bytes + (tq * HD + 2 * H * tq) * 4       # dbl-buffered blocks + f32 scratch

    return pl.pallas_call(
        kern,
        out_shape=jax.ShapeDtypeStruct((B, T, HD), q_arr.dtype),
        grid=(B, T // tq, T // tkv),                          # KV (reduction) axis last
        in_specs=[
            pl.BlockSpec((1, tq, HD), lambda b, qi, ki: (b, qi, qb)),
            pl.BlockSpec((1, tkv, HD), lambda b, qi, ki: (b, kv_idx(qi, ki), kb)),
            pl.BlockSpec((1, tkv, HD), lambda b, qi, ki: (b, kv_idx(qi, ki), vb)),
        ],
        out_specs=pl.BlockSpec((1, tq, HD), lambda b, qi, ki: (b, qi, 0)),
        scratch_shapes=[
            pltpu.VMEM((H, tq, 1), jnp.float32),              # running max
            pltpu.VMEM((H, tq, 1), jnp.float32),              # running sum
            pltpu.VMEM((tq, HD), jnp.float32),                # f32 accumulator (merged heads)
        ],
        compiler_params=pltpu.CompilerParams(
            dimension_semantics=("parallel", "parallel", "arbitrary"),
            vmem_limit_bytes=_vmem_limit(working),
        ),
    )(q_arr, k_arr, v_arr)


# ----------------------------- Head padding (128-lane stride) -----------------------------

def _pad_head_cols(w, b, H, d, d_pad):
    """(Din, H*d) weight / (H*d,) bias -> zero-padded so every head occupies d_pad columns."""
    Din = w.shape[0]
    w = jnp.pad(w.reshape(Din, H, d), ((0, 0), (0, 0), (0, d_pad - d)))
    b = jnp.pad(b.reshape(H, d), ((0, 0), (0, d_pad - d)))
    return w.reshape(Din, H * d_pad), b.reshape(H * d_pad)


def _pad_head_rows(w, H, d, d_pad):
    """(H*d, Dout) weight -> zero-padded so every head occupies d_pad rows."""
    Dout = w.shape[1]
    w = jnp.pad(w.reshape(H, d, Dout), ((0, 0), (0, d_pad - d), (0, 0)))
    return w.reshape(H * d_pad, Dout)


# ----------------------------- Full MHA forward -----------------------------

def mha_forward(params, q_in, k_in, v_in, *, H, Q, V, fwd_attn=True, local_attn_size=None,
                compute_dtype=jnp.bfloat16):
    """q_in, k_in, v_in: (B, T, D_embed) -> attn: (B, T, D_embed)."""
    B, T, D = q_in.shape
    # Pad each head to a 128-lane stride so head slices are lane-aligned and both attention
    # matmuls use a full 128-wide MXU contraction. Padded weight columns/rows are zero.
    Dh = max(_ceil_to(Q, 128), _ceil_to(V, 128))
    scale = 1.0 / (T ** 0.5)   # module scales by sqrt(seq_len) (not head dim) — intentional

    # Fold the softmax scale into the (tiny) Q projection parameters, in f32, once.
    w_q, b_q = _pad_head_cols(params["w_q"] * scale, params["b_q"] * scale, H, Q, Dh)
    w_k, b_k = _pad_head_cols(params["w_k"], params["b_k"], H, Q, Dh)
    w_v, b_v = _pad_head_cols(params["w_v"], params["b_v"], H, V, Dh)
    w_o = _pad_head_rows(params["w_o"], H, V, Dh)

    cd = compute_dtype
    if (q_in is k_in) and (k_in is v_in):
        # Self-attention fast path: one fused QKV matmul (x read from HBM once). The fused
        # output is NOT sliced in XLA: the attention kernel indexes feature blocks 0/1/2.
        # TODO(synk): identity check misses this path if the caller passes distinct tracers
        # for the same tensor (e.g. under jit); expose an explicit flag if needed.
        w_qkv = jnp.concatenate([w_q, w_k, w_v], axis=1).astype(cd)
        b_qkv = jnp.concatenate([b_q, b_k, b_v])
        qkv = pallas_linear(q_in.astype(cd), w_qkv, b_qkv, out_dtype=cd)   # (B, T, 3*H*Dh)
        attn = pallas_mha_attention(qkv, qkv, qkv, (0, 1, 2), H=H, Dh=Dh,
                                    fwd_attn=fwd_attn, local_attn_size=local_attn_size)
    else:
        q_p = pallas_linear(q_in.astype(cd), w_q.astype(cd), b_q, out_dtype=cd)
        k_p = pallas_linear(k_in.astype(cd), w_k.astype(cd), b_k, out_dtype=cd)
        v_p = pallas_linear(v_in.astype(cd), w_v.astype(cd), b_v, out_dtype=cd)
        attn = pallas_mha_attention(q_p, k_p, v_p, (0, 0, 0), H=H, Dh=Dh,
                                    fwd_attn=fwd_attn, local_attn_size=local_attn_size)

    # Output projection; padded W_o rows are zero so the padded attention columns are ignored.
    return pallas_linear(attn, w_o.astype(cd), params["b_o"], out_dtype=q_in.dtype)


# ----------------------------- Pure-JAX reference (verification) -----------------------------

def mha_reference(params, q_in, k_in, v_in, *, H, Q, V, fwd_attn=True, local_attn_size=None):
    B, T, D = q_in.shape
    q = (q_in @ params["w_q"] + params["b_q"]).reshape(B, T, H, Q).transpose(0, 2, 1, 3)
    k = (k_in @ params["w_k"] + params["b_k"]).reshape(B, T, H, Q).transpose(0, 2, 1, 3)
    v = (v_in @ params["w_v"] + params["b_v"]).reshape(B, T, H, V).transpose(0, 2, 1, 3)
    s = jnp.einsum("bhtq,bhsq->bhts", q, k) / (T ** 0.5)
    ii, jj = jnp.indices((T, T))
    if local_attn_size is not None:
        s = jnp.where(jnp.abs(ii - jj) > local_attn_size, -1e30, s)
    if fwd_attn:
        s = jnp.where(jj > ii, -1e30, s)
    p = jax.nn.softmax(s, axis=-1)
    a = jnp.einsum("bhts,bhsv->bhtv", p, v).transpose(0, 2, 1, 3).reshape(B, T, H * V)
    return a @ params["w_o"] + params["b_o"]


# ----------------------------- Main -----------------------------

if __name__ == "__main__":
    B, T, D_embed = 2, 8, 32
    Q, V, H = 8, 8, 4

    key = jax.random.PRNGKey(0)
    keys = jax.random.split(key, 11)

    def init_w(k, fan_in, fan_out):
        bound = 1.0 / (fan_in ** 0.5)
        return jax.random.uniform(k, (fan_in, fan_out), jnp.float32, -bound, bound)

    def init_b(k, fan_in, fan_out):
        bound = 1.0 / (fan_in ** 0.5)
        return jax.random.uniform(k, (fan_out,), jnp.float32, -bound, bound)

    params = {
        "w_q": init_w(keys[0], D_embed, Q * H), "b_q": init_b(keys[1], D_embed, Q * H),
        "w_k": init_w(keys[2], D_embed, Q * H), "b_k": init_b(keys[3], D_embed, Q * H),
        "w_v": init_w(keys[4], D_embed, V * H), "b_v": init_b(keys[5], D_embed, V * H),
        "w_o": init_w(keys[6], V * H, D_embed), "b_o": init_b(keys[7], V * H, D_embed),
    }

    x = jax.random.normal(keys[8], (B, T, D_embed), jnp.float32)
    k_in = jax.random.normal(keys[9], (B, T, D_embed), jnp.float32)
    v_in = jax.random.normal(keys[10], (B, T, D_embed), jnp.float32)

    def check(q_a, k_a, v_a, fwd, local, dtype, tol):
        out = mha_forward(params, q_a, k_a, v_a, H=H, Q=Q, V=V,
                          fwd_attn=fwd, local_attn_size=local, compute_dtype=dtype)
        out = jax.block_until_ready(out)
        ref = mha_reference(params, q_a, k_a, v_a, H=H, Q=Q, V=V,
                            fwd_attn=fwd, local_attn_size=local)
        assert out.shape == (B, T, D_embed)
        err = float(jnp.max(jnp.abs(out - ref)))
        assert jnp.allclose(out, ref, atol=tol, rtol=tol), f"mismatch vs reference ({err:.2e})"

    # 1) Self-attention (fused QKV + feature-block indexing), causal, bf16 MXU operands.
    check(x, x, x, True, None, jnp.bfloat16, 5e-2)
    # 2) Same path in f32 (tighter tolerance: validates padded-head / fused-index layout).
    check(x, x, x, True, None, jnp.float32, 1e-2)
    # 3) Distinct q/k/v inputs (general path), causal mask.
    check(x, k_in, v_in, True, None, jnp.bfloat16, 5e-2)
    # 4) Self-attention with local (band) + causal mask (exercises tile skip / DMA clamp).
    check(x, x, x, True, 2, jnp.bfloat16, 5e-2)
    # 5) No mask at all (full attention path).
    check(x, k_in, v_in, False, None, jnp.bfloat16, 5e-2)

    print("KERNEL_OK")
</pallas_src>

<mosaic_0001>
module attributes {stable_mosaic.version = 11 : i64} {
  func.func @_linear_kernel(%arg0: i32, %arg1: i32, %arg2: i32, %arg3: memref<16x32xbf16, #tpu.memory_space<vmem>>, %arg4: memref<32x512xbf16, #tpu.memory_space<vmem>>, %arg5: memref<1x512xf32, #tpu.memory_space<vmem>>, %arg6: memref<16x512xbf16, #tpu.memory_space<vmem>>, %arg7: memref<16x512xf32, #tpu.memory_space<vmem>>) attributes {dimension_semantics = [#tpu.dimension_semantics<parallel>, #tpu.dimension_semantics<parallel>, #tpu.dimension_semantics<arbitrary>], iteration_bounds = array<i64: 1, 3, 1>, scalar_prefetch = 0 : i64, scratch_operands = 1 : i64, tpu.core_type = #tpu.core_type<tc>, window_params = [{transform_indices = @transform_0, window_bounds = array<i64: 16, 32>}, {transform_indices = @transform_1, window_bounds = array<i64: 32, 512>}, {transform_indices = @transform_2, window_bounds = array<i64: 1, 512>}, {transform_indices = @transform_3, window_bounds = array<i64: 16, 512>}]} {
    %c0_i32 = arith.constant 0 : i32
    %0 = arith.cmpi eq, %arg2, %c0_i32 : i32
    %1 = arith.extui %0 : i1 to i32
    %c0_i32_0 = arith.constant 0 : i32
    %2 = arith.cmpi ne, %1, %c0_i32_0 : i32
    scf.if %2 {
      %cst_10 = arith.constant 0.000000e+00 : f32
      %12 = vector.broadcast %cst_10 : f32 to vector<16x512xf32>
      %c0_11 = arith.constant 0 : index
      %c0_12 = arith.constant 0 : index
      %13 = vector.load %arg7[%c0_11, %c0_12] : memref<16x512xf32, #tpu.memory_space<vmem>>, vector<16x512xf32>
      tpu.vector_store %arg7[%c0_11, %c0_12], %12 {strides = array<i32>} : memref<16x512xf32, #tpu.memory_space<vmem>>, vector<16x512xf32>,
    } else {
    }
    %c0 = arith.constant 0 : index
    %c0_1 = arith.constant 0 : index
    %3 = vector.load %arg7[%c0, %c0_1] : memref<16x512xf32, #tpu.memory_space<vmem>>, vector<16x512xf32>
    %c0_2 = arith.constant 0 : index
    %c0_3 = arith.constant 0 : index
    %4 = vector.load %arg3[%c0_2, %c0_3] : memref<16x32xbf16, #tpu.memory_space<vmem>>, vector<16x32xbf16>
    %c0_4 = arith.constant 0 : index
    %c0_5 = arith.constant 0 : index
    %5 = vector.load %arg4[%c0_4, %c0_5] : memref<32x512xbf16, #tpu.memory_space<vmem>>, vector<32x512xbf16>
    %cst = arith.constant dense<0.000000e+00> : vector<16x512xf32>
    %6 = tpu.matmul %4, %5, %cst {dimension_numbers = #tpu.dot_dimension_numbers<[1], [0], [0], [1], [0, 0, 1, 1], [], []>} : vector<16x32xbf16>, vector<32x512xbf16>, vector<16x512xf32> -> vector<16x512xf32>
    %7 = arith.addf %3, %6 : vector<16x512xf32>
    %c0_6 = arith.constant 0 : index
    %c0_7 = arith.constant 0 : index
    %8 = vector.load %arg7[%c0_6, %c0_7] : memref<16x512xf32, #tpu.memory_space<vmem>>, vector<16x512xf32>
    tpu.vector_store %arg7[%c0_6, %c0_7], %7 {strides = array<i32>} : memref<16x512xf32, #tpu.memory_space<vmem>>, vector<16x512xf32>,
    %c0_i32_8 = arith.constant 0 : i32
    %9 = arith.cmpi eq, %arg2, %c0_i32_8 : i32
    %10 = arith.extui %9 : i1 to i32
    %c0_i32_9 = arith.constant 0 : i32
    %11 = arith.cmpi ne, %10, %c0_i32_9 : i32
    scf.if %11 {
      %c0_10 = arith.constant 0 : index
      %c0_11 = arith.constant 0 : index
      %12 = vector.load %arg7[%c0_10, %c0_11] : memref<16x512xf32, #tpu.memory_space<vmem>>, vector<16x512xf32>
      %c0_12 = arith.constant 0 : index
      %c0_13 = arith.constant 0 : index
      %13 = vector.load %arg5[%c0_12, %c0_13] : memref<1x512xf32, #tpu.memory_space<vmem>>, vector<1x512xf32>
      %14 = vector.broadcast %13 : vector<1x512xf32> to vector<16x512xf32>
      %15 = arith.addf %12, %14 : vector<16x512xf32>
      %16 = arith.truncf %15 : vector<16x512xf32> to vector<16x512xbf16>
      %c0_14 = arith.constant 0 : index
      %c0_15 = arith.constant 0 : index
      %17 = vector.load %arg6[%c0_14, %c0_15] : memref<16x512xbf16, #tpu.memory_space<vmem>>, vector<16x512xbf16>
      tpu.vector_store %arg6[%c0_14, %c0_15], %16 {strides = array<i32>} : memref<16x512xbf16, #tpu.memory_space<vmem>>, vector<16x512xbf16>,
    } else {
    }
    return
  }
  func.func @transform_0(%arg0: i32, %arg1: i32, %arg2: i32) -> (i32, i32) {
    %c0_i32 = arith.constant 0 : i32
    return %arg0, %arg2 : i32, i32
  }
  func.func @transform_1(%arg0: i32, %arg1: i32, %arg2: i32) -> (i32, i32) {
    %c0_i32 = arith.constant 0 : i32
    return %arg2, %arg1 : i32, i32
  }
  func.func @transform_2(%arg0: i32, %arg1: i32, %arg2: i32) -> (i32, i32) {
    %c0_i32 = arith.constant 0 : i32
    %c0_i32_0 = arith.constant 0 : i32
    return %c0_i32, %arg1 : i32, i32
  }
  func.func @transform_3(%arg0: i32, %arg1: i32, %arg2: i32) -> (i32, i32) {
    %c0_i32 = arith.constant 0 : i32
    return %arg0, %arg1 : i32, i32
  }
}

</mosaic_0001>

<llo_original>
// kernel: tpu_custom_call.1
$region0: #{tpu_custom_call.1}
  #allocation0 [shape = 'u32[]', space=smem, size = 0x4, offset = 0x4, fixed_abs, tag = 'smem constant byte address 0x4 - core index']
  #allocation1 [shape = 'u32[144,128]{1,0:T(1,128)}', space=vmem, size = 0x12000, scoped, tag = 'internal scratch']
  #allocation2 [shape = 'f32[16,512]{1,0:T(8,128)}', space=vmem, size = 0x8000, scoped, tag = 'scratch operand']
  %s0 = inlined_call_operand.hbm [shape: bf16[16,32], index: 0, kind: input, shape index: {}]
  %s1 = inlined_call_operand.hbm [shape: bf16[32,1536], index: 1, kind: input, shape index: {}]
  %s2 = inlined_call_operand.hbm [shape: f32[1,1536], index: 2, kind: input, shape index: {}]
  %s3 = inlined_call_operand.hbm [shape: bf16[16,1536], index: 3, kind: output, shape index: {}]
  %s4 = sld [smem:[#allocation0]]
  $region65: #{tpu_custom_call.1} parent=0
    _
  %s6 = ssub.s32 1, %s4
  %s7 = scalar_select 0, %s6, %s4
  $region1: #{tpu_custom_call.1} parent=0
    #allocation3 [shape = 'u8[4096]{0}', space=vmem, size = 0x1000, scoped, tag = 'input window, operand 0, single buffered']
    #allocation4 [shape = 's32[2]{0}', space=sflag, size = 0x8, scoped, tag = 'scoped memory for tpu_custom_call.1']
    #allocation5 [shape = 's32[2]{0}', space=sflag, size = 0x8, scoped, tag = 'scoped memory for tpu_custom_call.1']
    #allocation6 [shape = 'u8[65536]{0}', space=vmem, size = 0x10000, scoped, tag = 'input window, operand 1']
    #allocation7 [shape = 's32[2]{0}', space=sflag, size = 0x8, scoped, tag = 'scoped memory for tpu_custom_call.1']
    #allocation8 [shape = 'u8[4096]{0}', space=vmem, size = 0x1000, scoped, tag = 'input window, operand 2']
    #allocation9 [shape = 'u8[32768]{0}', space=vmem, size = 0x8000, scoped, tag = 'output window, operand 0']
    %8 = vsyncpa [#allocation4], 0
    %9 = vsyncpa [#allocation7], 0
    %s10 = scalar_lea.sflag [#allocation7], 1
    %11 = vsyncpa %s10, 0
    %12 = vsyncpa [#allocation5], 0
    %s13 = scalar_lea.sflag [#allocation5], 1
    %14 = vsyncpa %s13, 0
    loop: start=0, step=1, limit=5
    $region2: #{tpu_custom_call.1} parent=1 // loop_pre_header
      _
    $region3: #{tpu_custom_call.1} parent=1 // loop_header
      %s16 = sphi 0, %s20
      %p17 = scmp.ge.s32.totalorder %s16, 5
      %s23 = sphi 0, %s42
      %s24 = sphi 0, %s38
      %s25 = sphi 0, %s34
      %s26 = sphi 0, %s23
      %s27 = sphi 0, %s24
      %s28 = sphi 0, %s25
      %s29 = sphi 0, %s26
      %s30 = sphi 0, %s27
      %s31 = sphi 0, %s28
      %s47 = sphi 0, %s49
      %s50 = sphi 0, %s47
      %s51 = sphi 0, %s50
      %s67 = sphi 0, %s51
      %s75 = sphi 0, %s77
      %s78 = sphi 0, %s75
      %s79 = sphi 0, %s78
      %s95 = sphi 0, %s79
      %s101 = sphi 0, %s103
      %s104 = sphi 0, %s101
      %s105 = sphi 0, %s104
      %s121 = sphi 0, %s105
      %s129 = sphi 0, %s131
      %s132 = sphi 0, %s129
      %s133 = sphi 0, %s132
      %s149 = sphi 0, %s133
    $region4: #{tpu_custom_call.1} parent=1 // loop_header_branch
      %19 = sbr.rel (%p17) target = $region8
    $region5: #{tpu_custom_call.1} parent=1 // loop_body
      %s21 = ssub.s32 %s16, 1
      %s22 = ssub.s32 %s16, 2
      %s32 = sadd.s32 1, %s25
      %p33 = scmp.ge.s32.totalorder %s32, 1
      %s34 = scalar_select %p33, 0, %s32
      %s35 = sadd.s32 1, %s24
      %s36 = scalar_select %p33, %s35, %s24
      %p37 = scmp.ge.s32.totalorder %s36, 3
      %s38 = scalar_select %p37, 0, %s36
      %s39 = sadd.s32 1, %s23
      %s40 = scalar_select %p37, %s39, %s23
      %p41 = scmp.ge.s32.totalorder %s40, 1
      %s42 = scalar_select %p41, 0, %s40
      %s43 = ssub.s32 %s23, %s42
      %s44 = ssub.s32 %s25, %s34
      %s45 = sor.u32 %s43, %s44
      %p46 = scmp.eq.s32.totalorder %s45, 0
      %s48 = sadd.s32 %s47, 1
      %s49 = scalar_select %p46, %s47, %s48
      %p52 = pneg %p46
      %p53 = scmp.eq.s32.totalorder %s16, 2
      %p54 = por %p52, %p53
      %p55 = scmp.ne.s32.totalorder %s47, %s50
      %p56 = scmp.eq.s32.totalorder %s16, 0
      %p57 = por %p55, %p56
      %p58 = scmp.ne.s32.totalorder %s47, %s50
      %p59 = scmp.eq.s32.totalorder %s21, 2
      %p60 = por %p58, %p59
      %p61 = scmp.ne.s32.totalorder %s50, %s51
      %p62 = scmp.eq.s32.totalorder %s21, 0
      %p63 = por %p61, %p62
      %p64 = scmp.ne.s32.totalorder %s50, %s51
      %p65 = scmp.eq.s32.totalorder %s22, 2
      %p66 = por %p64, %p65
      %p68 = scmp.ne.s32.totalorder %s51, %s67
      %p69 = scmp.eq.s32.totalorder %s22, 0
      %p70 = por %p68, %p69
      %s71 = ssub.s32 %s25, %s34
      %s72 = ssub.s32 %s24, %s38
      %s73 = sor.u32 %s71, %s72
      %p74 = scmp.eq.s32.totalorder %s73, 0
      %s76 = sadd.s32 %s75, 1
      %s77 = scalar_select %p74, %s75, %s76
      %p80 = pneg %p74
      %p81 = scmp.eq.s32.totalorder %s16, 2
      %p82 = por %p80, %p81
      %p83 = scmp.ne.s32.totalorder %s75, %s78
      %p84 = scmp.eq.s32.totalorder %s16, 0
      %p85 = por %p83, %p84
      %p86 = scmp.ne.s32.totalorder %s75, %s78
      %p87 = scmp.eq.s32.totalorder %s21, 2
      %p88 = por %p86, %p87
      %p89 = scmp.ne.s32.totalorder %s78, %s79
      %p90 = scmp.eq.s32.totalorder %s21, 0
      %p91 = por %p89, %p90
      %p92 = scmp.ne.s32.totalorder %s78, %s79
      %p93 = scmp.eq.s32.totalorder %s22, 2
      %p94 = por %p92, %p93
      %p96 = scmp.ne.s32.totalorder %s79, %s95
      %p97 = scmp.eq.s32.totalorder %s22, 0
      %p98 = por %p96, %p97
      %s99 = ssub.s32 %s24, %s38
      %p100 = scmp.eq.s32.totalorder %s99, 0
      %s102 = sadd.s32 %s101, 1
      %s103 = scalar_select %p100, %s101, %s102
      %p106 = pneg %p100
      %p107 = scmp.eq.s32.totalorder %s16, 2
      %p108 = por %p106, %p107
      %p109 = scmp.ne.s32.totalorder %s101, %s104
      %p110 = scmp.eq.s32.totalorder %s16, 0
      %p111 = por %p109, %p110
      %p112 = scmp.ne.s32.totalorder %s101, %s104
      %p113 = scmp.eq.s32.totalorder %s21, 2
      %p114 = por %p112, %p113
      %p115 = scmp.ne.s32.totalorder %s104, %s105
      %p116 = scmp.eq.s32.totalorder %s21, 0
      %p117 = por %p115, %p116
      %p118 = scmp.ne.s32.totalorder %s104, %s105
      %p119 = scmp.eq.s32.totalorder %s22, 2
      %p120 = por %p118, %p119
      %p122 = scmp.ne.s32.totalorder %s105, %s121
      %p123 = scmp.eq.s32.totalorder %s22, 0
      %p124 = por %p122, %p123
      %s125 = ssub.s32 %s23, %s42
      %s126 = ssub.s32 %s24, %s38
      %s127 = sor.u32 %s125, %s126
      %p128 = scmp.eq.s32.totalorder %s127, 0
      %s130 = sadd.s32 %s129, 1
      %s131 = scalar_select %p128, %s129, %s130
      %p134 = pneg %p128
      %p135 = scmp.eq.s32.totalorder %s16, 2
      %p136 = por %p134, %p135
      %p137 = scmp.ne.s32.totalorder %s129, %s132
      %p138 = scmp.eq.s32.totalorder %s16, 0
      %p139 = por %p137, %p138
      %p140 = scmp.ne.s32.totalorder %s129, %s132
      %p141 = scmp.eq.s32.totalorder %s21, 2
      %p142 = por %p140, %p141
      %p143 = scmp.ne.s32.totalorder %s132, %s133
      %p144 = scmp.eq.s32.totalorder %s21, 0
      %p145 = por %p143, %p144
      %p146 = scmp.ne.s32.totalorder %s132, %s133
      %p147 = scmp.eq.s32.totalorder %s22, 2
      %p148 = por %p146, %p147
      %p150 = scmp.ne.s32.totalorder %s133, %s149
      %p151 = scmp.eq.s32.totalorder %s22, 0
      %p152 = por %p150, %p151
      %p153 = scmp.le.s32.totalorder 1, %s16
      %p154 = scmp.lt.s32.totalorder %s16, 4
      %p155 = pnand %p153, %p154
      %p156 = pneg %p155
      // Predicated region
      $region9: #{tpu_custom_call.1} parent=5 // pred_check
        _
      $region10: #{tpu_custom_call.1} parent=5 // pred_check_branch
        %158 = sbr.rel (%p155) target = $region12
      $region11: #{tpu_custom_call.1} parent=5 // pred_region
        %s159 = ssub.s32 %s16, 1
        // Predicated region
        $region13: #{tpu_custom_call.1} parent=11 // pred_check
          %p160 = pneg %p63
        $region14: #{tpu_custom_call.1} parent=11 // pred_check_branch
          %162 = sbr.rel (%p160) target = $region16
        $region15: #{tpu_custom_call.1} parent=11 // pred_region
          %s163 = smul.u32 2, %s26
          %s165 = ssub.s32 128, 128
          %166 = vsyncadd [#allocation4], %s165
          %s167 = sadd.s32 %s28, %s163
          %s168 = smul.addr %s167, 64
          %s169 = scalar_lea.hbm %s0, %s168
          %s170 = sshll.u32 [#allocation3], 4
          %s171 = int_to_ptr.vmem [resolvable:$true] %s170
          %176 = dma.hbm_to_vmem [thread:$0]  %s169, 128, %s171, [#allocation4], 64, 64, 4
        $region16: #{tpu_custom_call.1} parent=11 // pred_fallthru
          _
      $region12: #{tpu_custom_call.1} parent=5 // pred_fallthru
        _
      %p177 = scmp.lt.s32.totalorder %s16, 3
      // Predicated region
      $region17: #{tpu_custom_call.1} parent=5 // pred_check
        %p178 = pneg %p177
      $region18: #{tpu_custom_call.1} parent=5 // pred_check_branch
        %180 = sbr.rel (%p178) target = $region20
      $region19: #{tpu_custom_call.1} parent=5 // pred_region
        // Predicated region
        $region21: #{tpu_custom_call.1} parent=19 // pred_check
          %p181 = pneg %p85
        $region22: #{tpu_custom_call.1} parent=19 // pred_check_branch
          %183 = sbr.rel (%p181) target = $region24
        $region23: #{tpu_custom_call.1} parent=19 // pred_region
          %s184 = sand.u32 %s16, 1
          %s185 = scalar_lea.sflag [#allocation7], %s184
          %s186 = sand.u32 %s75, 1
          %s187 = smul.addr %s186, 64
          %s188 = scalar_lea.vmem [#allocation6], %s187
          %s189 = smul.u32 4, %s25
          %s190 = smul.u32 4, %s24
          %s192 = ssub.s32 1024, 1024
          %193 = vsyncadd %s185, %s192
          %s194 = smul.addr %s189, 12
          %s195 = sadd.s32 %s190, %s194
          %s196 = smul.addr %s195, 64
          %s197 = scalar_lea.hbm %s1, %s196
          %s198 = sshll.u32 %s188, 4
          %s199 = int_to_ptr.vmem [resolvable:$true] %s198
          %204 = dma.hbm_to_vmem [thread:$0]  %s197, 1024, %s199, %s185, 768, 256, 16
        $region24: #{tpu_custom_call.1} parent=19 // pred_fallthru
          _
        // Predicated region
        $region25: #{tpu_custom_call.1} parent=19 // pred_check
          %p205 = pneg %p111
        $region26: #{tpu_custom_call.1} parent=19 // pred_check_branch
          %207 = sbr.rel (%p205) target = $region28
        $region27: #{tpu_custom_call.1} parent=19 // pred_region
          %s208 = sand.u32 %s16, 1
          %s209 = scalar_lea.sflag [#allocation7], %s208
          %s210 = sand.u32 %s101, 1
          %s211 = smul.addr %s210, 4
          %s212 = scalar_lea.vmem [#allocation8], %s211
          %s213 = smul.u32 4, %s24
          %s215 = ssub.s32 64, 64
          %216 = vsyncadd %s209, %s215
          %s217 = smul.addr %s213, 16
          %s218 = scalar_lea.hbm %s2, %s217
          %s220 = sshll.u32 %s212, 4
          %s221 = int_to_ptr.vmem [resolvable:$true] %s220
          %223 = dma.hbm_to_vmem [thread:$0]  %s218, 64, %s221, %s209
        $region28: #{tpu_custom_call.1} parent=19 // pred_fallthru
          _
      $region20: #{tpu_custom_call.1} parent=5 // pred_fallthru
        _
      %p224 = scmp.le.s32.totalorder 1, %s16
      %p225 = scmp.lt.s32.totalorder %s16, 4
      %p226 = pnand %p224, %p225
      %p227 = pneg %p226
      // Predicated region
      $region29: #{tpu_custom_call.1} parent=5 // pred_check
        _
      $region30: #{tpu_custom_call.1} parent=5 // pred_check_branch
        %229 = sbr.rel (%p226) target = $region32
      $region31: #{tpu_custom_call.1} parent=5 // pred_region
        %s230 = ssub.s32 %s16, 1
        // Predicated region
        $region33: #{tpu_custom_call.1} parent=31 // pred_check
          %p231 = pneg %p63
        $region34: #{tpu_custom_call.1} parent=31 // pred_check_branch
          %233 = sbr.rel (%p231) target = $region36
        $region35: #{tpu_custom_call.1} parent=31 // pred_region
          %234 = dma.done [#allocation4], 128
        $region36: #{tpu_custom_call.1} parent=31 // pred_fallthru
          _
        %s235 = sand.u32 %s21, 1
        %s236 = scalar_lea.sflag [#allocation7], %s235
        %s237 = sand.u32 %s78, 1
        %s238 = smul.addr %s237, 64
        %s239 = scalar_lea.vmem [#allocation6], %s238
        // Predicated region
        $region37: #{tpu_custom_call.1} parent=31 // pred_check
          %p240 = pneg %p91
        $region38: #{tpu_custom_call.1} parent=31 // pred_check_branch
          %242 = sbr.rel (%p240) target = $region40
        $region39: #{tpu_custom_call.1} parent=31 // pred_region
          %243 = dma.done %s236, 1024
        $region40: #{tpu_custom_call.1} parent=31 // pred_fallthru
          _
        %s244 = sand.u32 %s21, 1
        %s245 = scalar_lea.sflag [#allocation7], %s244
        %s246 = sand.u32 %s104, 1
        %s247 = smul.addr %s246, 4
        %s248 = scalar_lea.vmem [#allocation8], %s247
        // Predicated region
        $region41: #{tpu_custom_call.1} parent=31 // pred_check
          %p249 = pneg %p117
        $region42: #{tpu_custom_call.1} parent=31 // pred_check_branch
          %251 = sbr.rel (%p249) target = $region44
        $region43: #{tpu_custom_call.1} parent=31 // pred_region
          %252 = dma.done %s245, 64
        $region44: #{tpu_custom_call.1} parent=31 // pred_fallthru
          _
        %p253 = pneg %p63
        %p254 = pneg %p60
        %s255 = sand.u32 %s21, 1
        %s256 = scalar_lea.sflag [#allocation7], %s255
        %s257 = sand.u32 %s78, 1
        %s258 = smul.addr %s257, 64
        %s259 = scalar_lea.vmem [#allocation6], %s258
        %p260 = pneg %p91
        %p261 = pneg %p88
        %s262 = sand.u32 %s21, 1
        %s263 = scalar_lea.sflag [#allocation7], %s262
        %s264 = sand.u32 %s104, 1
        %s265 = smul.addr %s264, 4
        %s266 = scalar_lea.vmem [#allocation8], %s265
        %p267 = pneg %p117
        %p268 = pneg %p114
        %p269 = pneg %p145
        %p270 = pneg %p142
        %s271 = sand.u32 %s132, 1
        %s272 = scalar_lea.sflag [#allocation5], %s271
        %s273 = sand.u32 %s132, 1
        %s274 = smul.addr %s273, 32
        %s275 = scalar_lea.vmem [#allocation9], %s274
        %s276 = smul.u32 2, %s26
        %s277 = smul.u32 4, %s28
        %s278 = smul.u32 4, %s27
        %s279 = smul.u32 4, %s27
        %s280 = smul.u32 2, %s26
        %s281 = smul.u32 4, %s27
        %p283 = scmp.eq.s32.totalorder %s28, 0
        // Predicated region
        $region45: #{tpu_custom_call.1} parent=31 // pred_check
          %p284 = pneg %p283
        $region46: #{tpu_custom_call.1} parent=31 // pred_check_branch
          %286 = sbr.rel (%p284) target = $region48
        $region47: #{tpu_custom_call.1} parent=31 // pred_region
          %287 = vst [vmem:[#allocation2] sm:$0xff] 0.0
          %288 = vst [vmem:[#allocation2 + $0x8] sm:$0xff] 0.0
          %289 = vst [vmem:[#allocation2 + $0x10] sm:$0xff] 0.0
          %290 = vst [vmem:[#allocation2 + $0x18] sm:$0xff] 0.0
          %291 = vst [vmem:[#allocation2 + $0x20] sm:$0xff] 0.0
          %292 = vst [vmem:[#allocation2 + $0x28] sm:$0xff] 0.0
          %293 = vst [vmem:[#allocation2 + $0x30] sm:$0xff] 0.0
          %294 = vst [vmem:[#allocation2 + $0x38] sm:$0xff] 0.0
        $region48: #{tpu_custom_call.1} parent=31 // pred_fallthru
          _
        %v295 = vld [vmem:[#allocation2] sm:$0xff]
        %v296 = vld [vmem:[#allocation2 + $0x8] sm:$0xff]
        %v297 = vld [vmem:[#allocation2 + $0x10] sm:$0xff]
        %v298 = vld [vmem:[#allocation2 + $0x18] sm:$0xff]
        %v299 = vld [vmem:[#allocation2 + $0x20] sm:$0xff]
        %v300 = vld [vmem:[#allocation2 + $0x28] sm:$0xff]
        %v301 = vld [vmem:[#allocation2 + $0x30] sm:$0xff]
        %v302 = vld [vmem:[#allocation2 + $0x38] sm:$0xff]
        %v303 = vld [vmem:[#allocation3] sm:$0xf]
        %v304 = vld [vmem:[#allocation3 + $0x4] sm:$0xf]
        %v305 = vld [vmem:[%s239] sm:$0xff]
        %v306 = vld [vmem:[%s239 + $0x8] sm:$0xff]
        %v307 = vld [vmem:[%s239 + $0x10] sm:$0xff]
        %v308 = vld [vmem:[%s239 + $0x18] sm:$0xff]
        %v309 = vld [vmem:[%s239 + $0x20] sm:$0xff]
        %v310 = vld [vmem:[%s239 + $0x28] sm:$0xff]
        %v311 = vld [vmem:[%s239 + $0x30] sm:$0xff]
        %v312 = vld [vmem:[%s239 + $0x38] sm:$0xff]
        %v315 = vunpack.c.l.b16 %v303
        %v316 = vunpack.c.l.b16 %v304
        %v317 = vpack.c.b16 %v316, %v315
        %v326 = vunpack.c.l.b16 %v305
        %v327 = vunpack.c.h.b16 %v305
        %v328 = vunpack.c.l.b16 %v306
        %v329 = vunpack.c.h.b16 %v306
        %v330 = vunpack.c.l.b16 %v307
        %v331 = vunpack.c.h.b16 %v307
        %v332 = vunpack.c.l.b16 %v308
        %v333 = vunpack.c.h.b16 %v308
        %v334 = vunpack.c.l.b16 %v309
        %v335 = vunpack.c.h.b16 %v309
        %v336 = vunpack.c.l.b16 %v310
        %v337 = vunpack.c.h.b16 %v310
        %v338 = vunpack.c.l.b16 %v311
        %v339 = vunpack.c.h.b16 %v311
        %v340 = vunpack.c.l.b16 %v312
        %v341 = vunpack.c.h.b16 %v312
        %v342 = vpack.c.b16 %v330, %v326
        %v343 = vpack.c.b16 %v331, %v327
        %v344 = vpack.c.b16 %v332, %v328
        %v345 = vpack.c.b16 %v333, %v329
        %v346 = vpack.c.b16 %v338, %v334
        %v347 = vpack.c.b16 %v339, %v335
        %v348 = vpack.c.b16 %v340, %v336
        %v349 = vpack.c.b16 %v341, %v337
        %vm358 = vcmask 261120
        %v360 = vsel %vm358, %v317, 0
        %362 = vmatprep.subr.bf16.mxu0 %v343
        %363 = vmatpush1.bf16.msra.mxu0 %v342
        %364 = vmatprep.subr.bf16.mxu0 %v347
        %365 = vmatpush1.bf16.msra.mxu0 %v346
        %366 = vmatprep.subr.bf16.mxu0 0
        %367 = vmatpush1.bf16.msra.mxu0 0
        %368 = vmatprep.subr.bf16.mxu0 0
        %369 = vmatpush1.bf16.msra.mxu0 0
        %370 = vmatprep.subr.bf16.mxu0 0
        %371 = vmatpush1.bf16.msra.mxu0 0
        %372 = vmatprep.subr.bf16.mxu0 0
        %373 = vmatpush1.bf16.msra.mxu0 0
        %374 = vmatprep.subr.bf16.mxu0 0
        %375 = vmatpush1.bf16.msra.mxu0 0
        %376 = vmatprep.subr.bf16.mxu0 0
        %377 = vmatpush1.bf16.msra.mxu0 0
        %378 = vmatprep.subr.bf16.mxu0 0
        %379 = vmatpush1.bf16.msra.mxu0 0
        %380 = vmatprep.subr.bf16.mxu0 0
        %381 = vmatpush1.bf16.msra.mxu0 0
        %382 = vmatprep.subr.bf16.mxu0 0
        %383 = vmatpush1.bf16.msra.mxu0 0
        %384 = vmatprep.subr.bf16.mxu0 0
        %385 = vmatpush1.bf16.msra.mxu0 0
        %386 = vmatprep.subr.bf16.mxu0 0
        %387 = vmatpush1.bf16.msra.mxu0 0
        %388 = vmatprep.subr.bf16.mxu0 0
        %389 = vmatpush1.bf16.msra.mxu0 0
        %390 = vmatprep.subr.bf16.mxu0 0
        %391 = vmatpush1.bf16.msra.mxu0 0
        %392 = vmatprep.subr.bf16.mxu0 0
        %393 = vmatpush1.bf16.msra.mxu0 0
        %394 = vmatprep.mubr.bf16.mxu0 0
        %395 = vmatmul.mubr.bf16.gmra.mrb[0].mxu0 %v360
        %v396 = vpop.f32.mrb[0].mxu0
        %v397 = vadd.f32 0.0, %v396
        %v398 = vpop.f32.mrb[0].mxu0
        %v399 = vadd.f32 0.0, %v398
        %v400 = vpop.f32.mrb[0].mxu0
        %v401 = vadd.f32 0.0, %v400
        %v402 = vpop.f32.mrb[0].mxu0
        %v403 = vadd.f32 0.0, %v402
        %404 = vdwg.mxu0
        %405 = vmatprep.subr.bf16.mxu0 %v345
        %406 = vmatpush1.bf16.msra.mxu0 %v344
        %407 = vmatprep.subr.bf16.mxu0 %v349
        %408 = vmatpush1.bf16.msra.mxu0 %v348
        %409 = vmatprep.subr.bf16.mxu0 0
        %410 = vmatpush1.bf16.msra.mxu0 0
        %411 = vmatprep.subr.bf16.mxu0 0
        %412 = vmatpush1.bf16.msra.mxu0 0
        %413 = vmatprep.subr.bf16.mxu0 0
        %414 = vmatpush1.bf16.msra.mxu0 0
        %415 = vmatprep.subr.bf16.mxu0 0
        %416 = vmatpush1.bf16.msra.mxu0 0
        %417 = vmatprep.subr.bf16.mxu0 0
        %418 = vmatpush1.bf16.msra.mxu0 0
        %419 = vmatprep.subr.bf16.mxu0 0
        %420 = vmatpush1.bf16.msra.mxu0 0
        %421 = vmatprep.subr.bf16.mxu0 0
        %422 = vmatpush1.bf16.msra.mxu0 0
        %423 = vmatprep.subr.bf16.mxu0 0
        %424 = vmatpush1.bf16.msra.mxu0 0
        %425 = vmatprep.subr.bf16.mxu0 0
        %426 = vmatpush1.bf16.msra.mxu0 0
        %427 = vmatprep.subr.bf16.mxu0 0
        %428 = vmatpush1.bf16.msra.mxu0 0
        %429 = vmatprep.subr.bf16.mxu0 0
        %430 = vmatpush1.bf16.msra.mxu0 0
        %431 = vmatprep.subr.bf16.mxu0 0
        %432 = vmatpush1.bf16.msra.mxu0 0
        %433 = vmatprep.subr.bf16.mxu0 0
        %434 = vmatpush1.bf16.msra.mxu0 0
        %435 = vmatprep.subr.bf16.mxu0 0
        %436 = vmatpush1.bf16.msra.mxu0 0
        %437 = vmatprep.mubr.bf16.mxu0 0
        %438 = vmatmul.mubr.bf16.gmra.mrb[0].mxu0 %v360
        %v439 = vpop.f32.mrb[0].mxu0
        %v440 = vadd.f32 0.0, %v439
        %v441 = vpop.f32.mrb[0].mxu0
        %v442 = vadd.f32 0.0, %v441
        %v443 = vpop.f32.mrb[0].mxu0
        %v444 = vadd.f32 0.0, %v443
        %v445 = vpop.f32.mrb[0].mxu0
        %v446 = vadd.f32 0.0, %v445
        %447 = vdwg.mxu0
        %v448 = vadd.f32 %v295, %v397
        %v449 = vadd.f32 %v296, %v399
        %v450 = vadd.f32 %v297, %v440
        %v451 = vadd.f32 %v298, %v442
        %v452 = vadd.f32 %v299, %v401
        %v453 = vadd.f32 %v300, %v403
        %v454 = vadd.f32 %v301, %v444
        %v455 = vadd.f32 %v302, %v446
        %456 = vst [vmem:[#allocation2] sm:$0xff] %v448
        %457 = vst [vmem:[#allocation2 + $0x8] sm:$0xff] %v449
        %458 = vst [vmem:[#allocation2 + $0x10] sm:$0xff] %v450
        %459 = vst [vmem:[#allocation2 + $0x18] sm:$0xff] %v451
        %460 = vst [vmem:[#allocation2 + $0x20] sm:$0xff] %v452
        %461 = vst [vmem:[#allocation2 + $0x28] sm:$0xff] %v453
        %462 = vst [vmem:[#allocation2 + $0x30] sm:$0xff] %v454
        %463 = vst [vmem:[#allocation2 + $0x38] sm:$0xff] %v455
        // Predicated region
        $region49: #{tpu_custom_call.1} parent=31 // pred_check
          %p464 = pneg %p283
        $region50: #{tpu_custom_call.1} parent=31 // pred_check_branch
          %466 = sbr.rel (%p464) target = $region52
        $region51: #{tpu_custom_call.1} parent=31 // pred_region
          %v467 = vld [vmem:[#allocation2] sm:$0xff]
          %v468 = vld [vmem:[#allocation2 + $0x8] sm:$0xff]
          %v469 = vld [vmem:[#allocation2 + $0x10] sm:$0xff]
          %v470 = vld [vmem:[#allocation2 + $0x18] sm:$0xff]
          %v471 = vld [vmem:[#allocation2 + $0x20] sm:$0xff]
          %v472 = vld [vmem:[#allocation2 + $0x28] sm:$0xff]
          %v473 = vld [vmem:[#allocation2 + $0x30] sm:$0xff]
          %v474 = vld [vmem:[#allocation2 + $0x38] sm:$0xff]
          %v475 = vld [vmem:[%s248] sm:$0xf]
          %v477 = vlaneseq
          %v478 = vshrl.u32 %v477, 7
          %v479 = vsub.s32 0, %v478
          %v480 = vrot.slane %v475, %v479
          %v481 = vlaneseq
          %v482 = vshrl.u32 %v481, 7
          %v483 = vsub.s32 1, %v482
          %v484 = vrot.slane %v475, %v483
          %v485 = vlaneseq
          %v486 = vshrl.u32 %v485, 7
          %v487 = vsub.s32 2, %v486
          %v488 = vrot.slane %v475, %v487
          %v489 = vlaneseq
          %v490 = vshrl.u32 %v489, 7
          %v491 = vsub.s32 3, %v490
          %v492 = vrot.slane %v475, %v491
          %v497 = vadd.f32 %v467, %v480
          %v498 = vadd.f32 %v468, %v484
          %v499 = vadd.f32 %v469, %v488
          %v500 = vadd.f32 %v470, %v492
          %v501 = vadd.f32 %v471, %v480
          %v502 = vadd.f32 %v472, %v484
          %v503 = vadd.f32 %v473, %v488
          %v504 = vadd.f32 %v474, %v492
          %v505 = vpack.c.bf16 %v501, %v497
          %v506 = vpack.c.bf16 %v502, %v498
          %v507 = vpack.c.bf16 %v503, %v499
          %v508 = vpack.c.bf16 %v504, %v500
          %v513 = vunpack.c.l.b16 %v505
          %v514 = vunpack.c.l.b16 %v506
          %v515 = vunpack.c.l.b16 %v507
          %v516 = vunpack.c.l.b16 %v508
          %v517 = vunpack.c.h.b16 %v505
          %v518 = vunpack.c.h.b16 %v506
          %v519 = vunpack.c.h.b16 %v507
          %v520 = vunpack.c.h.b16 %v508
          %v521 = vpack.c.b16 %v514, %v513
          %v522 = vpack.c.b16 %v516, %v515
          %v523 = vpack.c.b16 %v518, %v517
          %v524 = vpack.c.b16 %v520, %v519
          %529 = vst [vmem:[%s275] sm:$0xff] %v521
          %530 = vst [vmem:[%s275 + $0x8] sm:$0xff] %v522
          %531 = vst [vmem:[%s275 + $0x10] sm:$0xff] %v523
          %532 = vst [vmem:[%s275 + $0x18] sm:$0xff] %v524
        $region52: #{tpu_custom_call.1} parent=31 // pred_fallthru
          _
        %s533 = sand.u32 %s132, 1
        %s534 = scalar_lea.sflag [#allocation5], %s533
        %s535 = sand.u32 %s132, 1
        %s536 = smul.addr %s535, 32
        %s537 = scalar_lea.vmem [#allocation9], %s536
        // Predicated region
        $region53: #{tpu_custom_call.1} parent=31 // pred_check
          %p538 = pneg %p142
        $region54: #{tpu_custom_call.1} parent=31 // pred_check_branch
          %540 = sbr.rel (%p538) target = $region56
        $region55: #{tpu_custom_call.1} parent=31 // pred_region
          %s541 = smul.u32 2, %s26
          %s542 = smul.u32 4, %s27
          %s544 = ssub.s32 512, 512
          %545 = vsyncadd %s534, %s544
          %s546 = smul.addr %s541, 12
          %s547 = sadd.s32 %s542, %s546
          %s548 = smul.addr %s547, 64
          %s549 = scalar_lea.hbm %s3, %s548
          %s550 = sshll.u32 %s537, 4
          %s551 = int_to_ptr.vmem [resolvable:$true] %s550
          %556 = dma.vmem_to_hbm [thread:$0]  %s551, 512, %s549, %s534, 256, 768, 16
        $region56: #{tpu_custom_call.1} parent=31 // pred_fallthru
          _
      $region32: #{tpu_custom_call.1} parent=5 // pred_fallthru
        _
      %p557 = scmp.le.s32.totalorder 2, %s16
      // Predicated region
      $region57: #{tpu_custom_call.1} parent=5 // pred_check
        %p558 = pneg %p557
      $region58: #{tpu_custom_call.1} parent=5 // pred_check_branch
        %560 = sbr.rel (%p558) target = $region60
      $region59: #{tpu_custom_call.1} parent=5 // pred_region
        %s561 = ssub.s32 %s16, 2
        // Predicated region
        $region61: #{tpu_custom_call.1} parent=59 // pred_check
          %p562 = pneg %p148
        $region62: #{tpu_custom_call.1} parent=59 // pred_check_branch
          %564 = sbr.rel (%p562) target = $region64
        $region63: #{tpu_custom_call.1} parent=59 // pred_region
          %s565 = sand.u32 %s133, 1
          %s566 = scalar_lea.sflag [#allocation5], %s565
          %s567 = sand.u32 %s133, 1
          %s568 = smul.addr %s567, 32
          %s569 = scalar_lea.vmem [#allocation9], %s568
          %570 = dma.done %s566, 512
        $region64: #{tpu_custom_call.1} parent=59 // pred_fallthru
          _
      $region60: #{tpu_custom_call.1} parent=5 // pred_fallthru
        _
    $region6: #{tpu_custom_call.1} parent=1 // loop_footer
      %s20 = sadd.s32 1, %s16
    $region7: #{tpu_custom_call.1} parent=1 // loop_footer_branch
      %15 = sbr.rel target = $region3
    $region8: #{tpu_custom_call.1} parent=1 // loop_exit
      _
    %571 = vsyncpa [#allocation4], 1
    %s572 = scalar_lea.sflag [#allocation4], 1
    %573 = vsyncpa %s572, 1
    %574 = vsyncpa [#allocation7], 1
    %s575 = scalar_lea.sflag [#allocation7], 1
    %576 = vsyncpa %s575, 1
    %577 = vsyncpa [#allocation5], 1
    %s578 = scalar_lea.sflag [#allocation5], 1
    %579 = vsyncpa %s578, 1

</llo_original>
